<compile_context>
chip_gen: v7x
topology: tpu7x:2x2x1
jax: 0.10.0
libtpu: 0.0.40
codegen_flags: <defaults>
</compile_context>

<pallas_src>
import jax
import jax.numpy as jnp
from jax.experimental import pallas as pl
from jax.experimental.pallas import tpu as pltpu


# ----------------------------- parameters ----------------------------------

def init_params(key, C, T, V, Cf, Hf, Wf, Dv, hidden, n_clss):
    """Synthetic pedMondel weights, pre-packed into kernel-ready arrays."""
    ks = jax.random.split(key, 5)

    # normalized chain-graph adjacency over V joints (A + I, row-normalized)
    A = (jnp.eye(V, dtype=jnp.float32)
         + jnp.eye(V, k=1, dtype=jnp.float32)
         + jnp.eye(V, k=-1, dtype=jnp.float32))
    A = A / jnp.sum(A, axis=1, keepdims=True)

    Wg = 0.1 * jax.random.normal(ks[0], (C, C), jnp.float32)        # 1x1 conv
    W1g = 0.1 * jax.random.normal(ks[1], (C, hidden), jnp.float32)
    W1f = 0.1 * jax.random.normal(ks[2], (Cf, hidden), jnp.float32)
    W1v = 0.1 * jax.random.normal(ks[3], (Dv, hidden), jnp.float32)
    b1 = jnp.zeros((1, hidden), jnp.float32)
    W2 = 0.1 * jax.random.normal(ks[4], (hidden, n_clss), jnp.float32)
    b2 = jnp.zeros((1, n_clss), jnp.float32)

    # --- kernel-ready packing (done once, outside the hot path) ---
    # joint aggregation as a lane-dense right-multiply on [*, T*V]
    KA = jnp.kron(jnp.eye(T, dtype=jnp.float32), A)                 # [T*V, T*V]
    # head weights: pooling scale folded in, bias b1 folded in as last row
    W1pack = jnp.concatenate(
        [W1g / float(T * V), W1f / float(Hf * Wf), W1v / float(T), b1], axis=0)
    W2pack = jnp.concatenate([W2, b2], axis=0)                      # [H+1, n]

    return {
        "Wg": Wg,                               # [C, C]  f32 (kron'd per call)
        "KA": KA.astype(jnp.bfloat16),          # [T*V, T*V]
        "W1pack": W1pack.astype(jnp.float32),   # [C+Cf+Dv+1, H] (VPU path)
        "W2pack": W2pack.astype(jnp.bfloat16),  # [H+1, n_clss]
    }


# ----------------------------- fused forward -------------------------------

def muster_forward(params, x, f, v):
    """x: [B, C, T, V] pose, f: [B, Cf, Hf, Wf] image ctx, v: [B, Dv, T]."""
    B, C, T, V = x.shape
    _, Cf, Hf, Wf = f.shape
    _, Dv, _ = v.shape
    TV, HW = T * V, Hf * Wf
    H = params["W1pack"].shape[1]
    n_clss = params["W2pack"].shape[1]

    # free reshapes only (no transposes): batch*channel rows, fused minor axes
    xs = x.reshape(B * C, TV).astype(jnp.bfloat16)        # [B*C, T*V]
    fs = f.reshape(B * Cf, HW).astype(jnp.bfloat16)       # [B*Cf, Hf*Wf]
    vs = v.reshape(B * Dv, T).astype(jnp.bfloat16)        # [B*Dv, T]

    # block-diagonal channel-mix so the 1x1 conv batches over B (tiny: B*C sq)
    bdwg = jnp.kron(jnp.eye(B, dtype=jnp.float32),
                    params["Wg"]).astype(jnp.bfloat16)    # [B*C, B*C]
    ka = params["KA"]
    w1pack, w2pack = params["W1pack"], params["W2pack"]

    def kernel(xs_ref, fs_ref, vs_ref, bdwg_ref, ka_ref, w1_ref, w2_ref,
               o_ref):
        # --- pose stream, whole batch at once: 2 MXU matmuls total ---
        z = jnp.dot(xs_ref[...], ka_ref[...],
                    preferred_element_type=jnp.float32)            # [B*C, TV]
        y = jnp.maximum(
            jnp.dot(bdwg_ref[...], z.astype(jnp.bfloat16),
                    preferred_element_type=jnp.float32), 0.0)      # [B*C, TV]

        w1 = w1_ref[...]                                           # f32
        w2 = w2_ref[...]                                           # bf16

        # shared lane-axis pooled sums (pooling scales baked into w1)
        rs_p_all = jnp.sum(y, axis=1, keepdims=True)               # [B*C, 1]
        rs_f_all = jnp.sum(fs_ref[...].astype(jnp.float32),
                           axis=1, keepdims=True)                  # [B*Cf, 1]
        rs_v_all = jnp.sum(vs_ref[...].astype(jnp.float32),
                           axis=1, keepdims=True)                  # [B*Dv, 1]

        b1 = w1[C + Cf + Dv:C + Cf + Dv + 1]                       # [1, H]

        # per-batch fused head (static unroll; B is small, all work is tiny)
        for b in range(B):
            c_p = jnp.sum(rs_p_all[b * C:(b + 1) * C] * w1[0:C],
                          axis=0, keepdims=True)                   # [1, H]
            c_f = jnp.sum(rs_f_all[b * Cf:(b + 1) * Cf] * w1[C:C + Cf],
                          axis=0, keepdims=True)
            c_v = jnp.sum(rs_v_all[b * Dv:(b + 1) * Dv]
                          * w1[C + Cf:C + Cf + Dv],
                          axis=0, keepdims=True)

            h = jnp.maximum(c_p + c_f + c_v + b1, 0.0)             # [1, H]

            logits = (jnp.dot(h.astype(jnp.bfloat16), w2[0:H],
                              preferred_element_type=jnp.float32)
                      + w2[H:H + 1].astype(jnp.float32))           # [1, n]

            # softmax over class dim — matches `.softmax(1)` in the module
            m = jnp.max(logits, axis=1, keepdims=True)
            e = jnp.exp(logits - m)
            probs = e / jnp.sum(e, axis=1, keepdims=True)
            o_ref[b:b + 1, :] = probs.astype(o_ref.dtype)

    flops = (2 * (B * C) * TV * TV            # X @ KA
             + 2 * (B * C) * (B * C) * TV     # block-diag Wg @ Z
             + B * (2 * (C + Cf + Dv + 1) * H + 2 * (H + 1) * n_clss))
    bytes_accessed = (xs.size * 2 + fs.size * 2 + vs.size * 2
                      + bdwg.size * 2 + ka.size * 2
                      + w1pack.size * 4 + w2pack.size * 2 + B * n_clss * 4)

    vmem = pl.BlockSpec(memory_space=pltpu.MemorySpace.VMEM)
    out = pl.pallas_call(
        kernel,
        out_shape=jax.ShapeDtypeStruct((B, n_clss), jnp.float32),
        in_specs=[vmem] * 7,
        out_specs=vmem,
        cost_estimate=pl.CostEstimate(
            flops=flops, transcendentals=B * n_clss,
            bytes_accessed=bytes_accessed),
    )(xs, fs, vs, bdwg, ka, w1pack, w2pack)

    return out


# --------------------------------- main -------------------------------------

if __name__ == "__main__":
    B, C, T, V = 2, 4, 8, 16        # batch, keypoint channels, frames, joints
    Cf, Hf, Wf = 4, 8, 8            # image-context channels / spatial
    Dv = 2                          # velocity channels
    hidden, n_clss = 32, 3

    key = jax.random.PRNGKey(0)
    kx, kf, kv, kp = jax.random.split(key, 4)

    x = jax.random.normal(kx, (B, C, T, V), jnp.float32)
    f = jax.random.normal(kf, (B, Cf, Hf, Wf), jnp.float32)
    v = jax.random.normal(kv, (B, Dv, T), jnp.float32)

    params = init_params(kp, C, T, V, Cf, Hf, Wf, Dv, hidden, n_clss)

    fwd = jax.jit(muster_forward)
    probs = fwd(params, x, f, v)
    probs = jax.block_until_ready(probs)

    assert probs.shape == (B, n_clss)
    assert bool(jnp.all(jnp.abs(jnp.sum(probs, axis=1) - 1.0) < 1e-5))
    print("KERNEL_OK")
</pallas_src>

<mosaic_0001>
module attributes {stable_mosaic.version = 11 : i64} {
  func.func @kernel(%arg0: memref<8x128xbf16, #tpu.memory_space<vmem>>, %arg1: memref<8x64xbf16, #tpu.memory_space<vmem>>, %arg2: memref<4x8xbf16, #tpu.memory_space<vmem>>, %arg3: memref<8x8xbf16, #tpu.memory_space<vmem>>, %arg4: memref<128x128xbf16, #tpu.memory_space<vmem>>, %arg5: memref<11x32xf32, #tpu.memory_space<vmem>>, %arg6: memref<33x3xbf16, #tpu.memory_space<vmem>>, %arg7: memref<2x3xf32, #tpu.memory_space<vmem>>) attributes {dimension_semantics = [], scalar_prefetch = 0 : i64, scratch_operands = 0 : i64, tpu.core_type = #tpu.core_type<tc>} {
    %c0 = arith.constant 0 : index
    %c0_0 = arith.constant 0 : index
    %0 = vector.load %arg0[%c0, %c0_0] : memref<8x128xbf16, #tpu.memory_space<vmem>>, vector<8x128xbf16>
    %c0_1 = arith.constant 0 : index
    %c0_2 = arith.constant 0 : index
    %1 = vector.load %arg4[%c0_1, %c0_2] : memref<128x128xbf16, #tpu.memory_space<vmem>>, vector<128x128xbf16>
    %cst = arith.constant dense<0.000000e+00> : vector<8x128xf32>
    %2 = tpu.matmul %0, %1, %cst {dimension_numbers = #tpu.dot_dimension_numbers<[1], [0], [0], [1], [0, 0, 1, 1], [], []>} : vector<8x128xbf16>, vector<128x128xbf16>, vector<8x128xf32> -> vector<8x128xf32>
    %c0_3 = arith.constant 0 : index
    %c0_4 = arith.constant 0 : index
    %3 = vector.load %arg3[%c0_3, %c0_4] : memref<8x8xbf16, #tpu.memory_space<vmem>>, vector<8x8xbf16>
    %4 = arith.truncf %2 : vector<8x128xf32> to vector<8x128xbf16>
    %cst_5 = arith.constant dense<0.000000e+00> : vector<8x128xf32>
    %5 = tpu.matmul %3, %4, %cst_5 {dimension_numbers = #tpu.dot_dimension_numbers<[1], [0], [0], [1], [0, 0, 1, 1], [], []>} : vector<8x8xbf16>, vector<8x128xbf16>, vector<8x128xf32> -> vector<8x128xf32>
    %cst_6 = arith.constant 0.000000e+00 : f32
    %6 = vector.broadcast %cst_6 : f32 to vector<8x128xf32>
    %7 = arith.maximumf %5, %6 : vector<8x128xf32>
    %c0_7 = arith.constant 0 : index
    %c0_8 = arith.constant 0 : index
    %8 = vector.load %arg5[%c0_7, %c0_8] : memref<11x32xf32, #tpu.memory_space<vmem>>, vector<11x32xf32>
    %c0_9 = arith.constant 0 : index
    %c0_10 = arith.constant 0 : index
    %9 = vector.load %arg6[%c0_9, %c0_10] : memref<33x3xbf16, #tpu.memory_space<vmem>>, vector<33x3xbf16>
    %cst_11 = arith.constant dense<0.000000e+00> : vector<8xf32>
    %10 = vector.multi_reduction <add>, %7, %cst_11 [1] : vector<8x128xf32> to vector<8xf32>
    %11 = vector.shape_cast %10 : vector<8xf32> to vector<8x1xf32>
    %c0_12 = arith.constant 0 : index
    %c0_13 = arith.constant 0 : index
    %12 = vector.load %arg1[%c0_12, %c0_13] : memref<8x64xbf16, #tpu.memory_space<vmem>>, vector<8x64xbf16>
    %13 = arith.extf %12 : vector<8x64xbf16> to vector<8x64xf32>
    %cst_14 = arith.constant dense<0.000000e+00> : vector<8xf32>
    %14 = vector.multi_reduction <add>, %13, %cst_14 [1] : vector<8x64xf32> to vector<8xf32>
    %15 = vector.shape_cast %14 : vector<8xf32> to vector<8x1xf32>
    %c0_15 = arith.constant 0 : index
    %c0_16 = arith.constant 0 : index
    %16 = vector.load %arg2[%c0_15, %c0_16] : memref<4x8xbf16, #tpu.memory_space<vmem>>, vector<4x8xbf16>
    %17 = arith.extf %16 : vector<4x8xbf16> to vector<4x8xf32>
    %cst_17 = arith.constant dense<0.000000e+00> : vector<4xf32>
    %18 = vector.multi_reduction <add>, %17, %cst_17 [1] : vector<4x8xf32> to vector<4xf32>
    %19 = vector.shape_cast %18 : vector<4xf32> to vector<4x1xf32>
    %20 = vector.extract_strided_slice %8 {offsets = [10, 0], sizes = [1, 32], strides = [1, 1]} : vector<11x32xf32> to vector<1x32xf32>
    %21 = vector.extract_strided_slice %11 {offsets = [0, 0], sizes = [4, 1], strides = [1, 1]} : vector<8x1xf32> to vector<4x1xf32>
    %22 = vector.extract_strided_slice %8 {offsets = [0, 0], sizes = [4, 32], strides = [1, 1]} : vector<11x32xf32> to vector<4x32xf32>
    %23 = vector.broadcast %21 : vector<4x1xf32> to vector<4x32xf32>
    %24 = arith.mulf %23, %22 : vector<4x32xf32>
    %cst_18 = arith.constant dense<0.000000e+00> : vector<32xf32>
    %25 = vector.multi_reduction <add>, %24, %cst_18 [0] : vector<4x32xf32> to vector<32xf32>
    %26 = vector.shape_cast %25 : vector<32xf32> to vector<1x32xf32>
    %27 = vector.extract_strided_slice %15 {offsets = [0, 0], sizes = [4, 1], strides = [1, 1]} : vector<8x1xf32> to vector<4x1xf32>
    %28 = vector.extract_strided_slice %8 {offsets = [4, 0], sizes = [4, 32], strides = [1, 1]} : vector<11x32xf32> to vector<4x32xf32>
    %29 = vector.broadcast %27 : vector<4x1xf32> to vector<4x32xf32>
    %30 = arith.mulf %29, %28 : vector<4x32xf32>
    %cst_19 = arith.constant dense<0.000000e+00> : vector<32xf32>
    %31 = vector.multi_reduction <add>, %30, %cst_19 [0] : vector<4x32xf32> to vector<32xf32>
    %32 = vector.shape_cast %31 : vector<32xf32> to vector<1x32xf32>
    %33 = vector.extract_strided_slice %19 {offsets = [0, 0], sizes = [2, 1], strides = [1, 1]} : vector<4x1xf32> to vector<2x1xf32>
    %34 = vector.extract_strided_slice %8 {offsets = [8, 0], sizes = [2, 32], strides = [1, 1]} : vector<11x32xf32> to vector<2x32xf32>
    %35 = vector.broadcast %33 : vector<2x1xf32> to vector<2x32xf32>
    %36 = arith.mulf %35, %34 : vector<2x32xf32>
    %cst_20 = arith.constant dense<0.000000e+00> : vector<32xf32>
    %37 = vector.multi_reduction <add>, %36, %cst_20 [0] : vector<2x32xf32> to vector<32xf32>
    %38 = vector.shape_cast %37 : vector<32xf32> to vector<1x32xf32>
    %39 = arith.addf %26, %32 : vector<1x32xf32>
    %40 = arith.addf %39, %38 : vector<1x32xf32>
    %41 = arith.addf %40, %20 : vector<1x32xf32>
    %cst_21 = arith.constant 0.000000e+00 : f32
    %42 = vector.broadcast %cst_21 : f32 to vector<1x32xf32>
    %43 = arith.maximumf %41, %42 : vector<1x32xf32>
    %44 = arith.truncf %43 : vector<1x32xf32> to vector<1x32xbf16>
    %45 = vector.extract_strided_slice %9 {offsets = [0, 0], sizes = [32, 3], strides = [1, 1]} : vector<33x3xbf16> to vector<32x3xbf16>
    %cst_22 = arith.constant dense<0.000000e+00> : vector<1x3xf32>
    %46 = tpu.matmul %44, %45, %cst_22 {dimension_numbers = #tpu.dot_dimension_numbers<[1], [0], [0], [1], [0, 0, 1, 1], [], []>} : vector<1x32xbf16>, vector<32x3xbf16>, vector<1x3xf32> -> vector<1x3xf32>
    %47 = vector.extract_strided_slice %9 {offsets = [32, 0], sizes = [1, 3], strides = [1, 1]} : vector<33x3xbf16> to vector<1x3xbf16>
    %48 = arith.extf %47 : vector<1x3xbf16> to vector<1x3xf32>
    %49 = arith.addf %46, %48 : vector<1x3xf32>
    %cst_23 = arith.constant dense<0xFF800000> : vector<1xf32>
    %50 = vector.multi_reduction <maximumf>, %49, %cst_23 [1] : vector<1x3xf32> to vector<1xf32>
    %51 = vector.shape_cast %50 : vector<1xf32> to vector<1x1xf32>
    %52 = vector.broadcast %51 : vector<1x1xf32> to vector<1x3xf32>
    %53 = arith.subf %49, %52 : vector<1x3xf32>
    %54 = math.exp %53 : vector<1x3xf32>
    %cst_24 = arith.constant dense<0.000000e+00> : vector<1xf32>
    %55 = vector.multi_reduction <add>, %54, %cst_24 [1] : vector<1x3xf32> to vector<1xf32>
    %56 = vector.shape_cast %55 : vector<1xf32> to vector<1x1xf32>
    %57 = vector.broadcast %56 : vector<1x1xf32> to vector<1x3xf32>
    %58 = arith.divf %54, %57 : vector<1x3xf32>
    %c0_25 = arith.constant 0 : index
    %c0_26 = arith.constant 0 : index
    %59 = vector.load %arg7[%c0_25, %c0_26] : memref<2x3xf32, #tpu.memory_space<vmem>>, vector<1x3xf32>
    tpu.vector_store %arg7[%c0_25, %c0_26], %58 {strides = array<i32>} : memref<2x3xf32, #tpu.memory_space<vmem>>, vector<1x3xf32>,
    %60 = vector.extract_strided_slice %11 {offsets = [4, 0], sizes = [4, 1], strides = [1, 1]} : vector<8x1xf32> to vector<4x1xf32>
    %61 = vector.extract_strided_slice %8 {offsets = [0, 0], sizes = [4, 32], strides = [1, 1]} : vector<11x32xf32> to vector<4x32xf32>
    %62 = vector.broadcast %60 : vector<4x1xf32> to vector<4x32xf32>
    %63 = arith.mulf %62, %61 : vector<4x32xf32>
    %cst_27 = arith.constant dense<0.000000e+00> : vector<32xf32>
    %64 = vector.multi_reduction <add>, %63, %cst_27 [0] : vector<4x32xf32> to vector<32xf32>
    %65 = vector.shape_cast %64 : vector<32xf32> to vector<1x32xf32>
    %66 = vector.extract_strided_slice %15 {offsets = [4, 0], sizes = [4, 1], strides = [1, 1]} : vector<8x1xf32> to vector<4x1xf32>
    %67 = vector.extract_strided_slice %8 {offsets = [4, 0], sizes = [4, 32], strides = [1, 1]} : vector<11x32xf32> to vector<4x32xf32>
    %68 = vector.broadcast %66 : vector<4x1xf32> to vector<4x32xf32>
    %69 = arith.mulf %68, %67 : vector<4x32xf32>
    %cst_28 = arith.constant dense<0.000000e+00> : vector<32xf32>
    %70 = vector.multi_reduction <add>, %69, %cst_28 [0] : vector<4x32xf32> to vector<32xf32>
    %71 = vector.shape_cast %70 : vector<32xf32> to vector<1x32xf32>
    %72 = vector.extract_strided_slice %19 {offsets = [2, 0], sizes = [2, 1], strides = [1, 1]} : vector<4x1xf32> to vector<2x1xf32>
    %73 = vector.extract_strided_slice %8 {offsets = [8, 0], sizes = [2, 32], strides = [1, 1]} : vector<11x32xf32> to vector<2x32xf32>
    %74 = vector.broadcast %72 : vector<2x1xf32> to vector<2x32xf32>
    %75 = arith.mulf %74, %73 : vector<2x32xf32>
    %cst_29 = arith.constant dense<0.000000e+00> : vector<32xf32>
    %76 = vector.multi_reduction <add>, %75, %cst_29 [0] : vector<2x32xf32> to vector<32xf32>
    %77 = vector.shape_cast %76 : vector<32xf32> to vector<1x32xf32>
    %78 = arith.addf %65, %71 : vector<1x32xf32>
    %79 = arith.addf %78, %77 : vector<1x32xf32>
    %80 = arith.addf %79, %20 : vector<1x32xf32>
    %cst_30 = arith.constant 0.000000e+00 : f32
    %81 = vector.broadcast %cst_30 : f32 to vector<1x32xf32>
    %82 = arith.maximumf %80, %81 : vector<1x32xf32>
    %83 = arith.truncf %82 : vector<1x32xf32> to vector<1x32xbf16>
    %84 = vector.extract_strided_slice %9 {offsets = [0, 0], sizes = [32, 3], strides = [1, 1]} : vector<33x3xbf16> to vector<32x3xbf16>
    %cst_31 = arith.constant dense<0.000000e+00> : vector<1x3xf32>
    %85 = tpu.matmul %83, %84, %cst_31 {dimension_numbers = #tpu.dot_dimension_numbers<[1], [0], [0], [1], [0, 0, 1, 1], [], []>} : vector<1x32xbf16>, vector<32x3xbf16>, vector<1x3xf32> -> vector<1x3xf32>
    %86 = vector.extract_strided_slice %9 {offsets = [32, 0], sizes = [1, 3], strides = [1, 1]} : vector<33x3xbf16> to vector<1x3xbf16>
    %87 = arith.extf %86 : vector<1x3xbf16> to vector<1x3xf32>
    %88 = arith.addf %85, %87 : vector<1x3xf32>
    %cst_32 = arith.constant dense<0xFF800000> : vector<1xf32>
    %89 = vector.multi_reduction <maximumf>, %88, %cst_32 [1] : vector<1x3xf32> to vector<1xf32>
    %90 = vector.shape_cast %89 : vector<1xf32> to vector<1x1xf32>
    %91 = vector.broadcast %90 : vector<1x1xf32> to vector<1x3xf32>
    %92 = arith.subf %88, %91 : vector<1x3xf32>
    %93 = math.exp %92 : vector<1x3xf32>
    %cst_33 = arith.constant dense<0.000000e+00> : vector<1xf32>
    %94 = vector.multi_reduction <add>, %93, %cst_33 [1] : vector<1x3xf32> to vector<1xf32>
    %95 = vector.shape_cast %94 : vector<1xf32> to vector<1x1xf32>
    %96 = vector.broadcast %95 : vector<1x1xf32> to vector<1x3xf32>
    %97 = arith.divf %93, %96 : vector<1x3xf32>
    %c1 = arith.constant 1 : index
    %c0_34 = arith.constant 0 : index
    %98 = vector.load %arg7[%c1, %c0_34] : memref<2x3xf32, #tpu.memory_space<vmem>>, vector<1x3xf32>
    tpu.vector_store %arg7[%c1, %c0_34], %97 {strides = array<i32>} : memref<2x3xf32, #tpu.memory_space<vmem>>, vector<1x3xf32>,
    return
  }
}

</mosaic_0001>

<llo_original>
// kernel: muster_forward.1
$region0: #{muster_forward.1}
  #allocation0 [shape = 'u32[]', space=smem, size = 0x4, offset = 0x4, fixed_abs, tag = 'smem constant byte address 0x4 - core index']
  #allocation1 [shape = 'u32[144,128]{1,0:T(1,128)}', space=vmem, size = 0x12000, scoped, tag = 'internal scratch']
  %s0 = inlined_call_operand.vmem [shape: bf16[8,128], index: 0, kind: input, shape index: {}]
  %s1 = inlined_call_operand.vmem [shape: bf16[8,64], index: 1, kind: input, shape index: {}]
  %s2 = inlined_call_operand.vmem [shape: bf16[4,8], index: 2, kind: input, shape index: {}]
  %s3 = inlined_call_operand.vmem [shape: bf16[8,8], index: 3, kind: input, shape index: {}]
  %s4 = inlined_call_operand.vmem [shape: bf16[128,128], index: 4, kind: input, shape index: {}]
  %s5 = inlined_call_operand.vmem [shape: f32[11,32], index: 5, kind: input, shape index: {}]
  %s6 = inlined_call_operand.vmem [shape: bf16[33,3], index: 6, kind: input, shape index: {}]
  %s7 = inlined_call_operand.hbm [shape: f32[2,3], index: 7, kind: output, shape index: {}]
  %s8 = sld [smem:[#allocation0]]
  $region38: #{muster_forward.1} parent=0
    _
  %s10 = ssub.s32 1, %s8
  %s11 = scalar_select 0, %s10, %s8
  $region1: #{muster_forward.1} parent=0
    #allocation2 [shape = 'u8[1024]{0}', space=vmem, size = 0x400, scoped, tag = 'output window, operand 0, single buffered']
    #allocation3 [shape = 's32[1]{0}', space=sflag, size = 0x4, scoped, tag = 'scoped memory for muster_forward.1']
    %12 = vsyncpa [#allocation3], 0
    // Predicated region
    $region2: #{muster_forward.1} parent=1 // pred_check
      _
    $region3: #{muster_forward.1} parent=1 // pred_check_branch
      %14 = sbr.rel (0) target = $region5
    $region4: #{muster_forward.1} parent=1 // pred_region
      _
    $region5: #{muster_forward.1} parent=1 // pred_fallthru
      _
    // Predicated region
    $region6: #{muster_forward.1} parent=1 // pred_check
      _
    $region7: #{muster_forward.1} parent=1 // pred_check_branch
      %16 = sbr.rel (0) target = $region9
    $region8: #{muster_forward.1} parent=1 // pred_region
      _
    $region9: #{muster_forward.1} parent=1 // pred_fallthru
      _
    // Predicated region
    $region10: #{muster_forward.1} parent=1 // pred_check
      _
    $region11: #{muster_forward.1} parent=1 // pred_check_branch
      %18 = sbr.rel (0) target = $region13
    $region12: #{muster_forward.1} parent=1 // pred_region
      _
    $region13: #{muster_forward.1} parent=1 // pred_fallthru
      _
    // Predicated region
    $region14: #{muster_forward.1} parent=1 // pred_check
      _
    $region15: #{muster_forward.1} parent=1 // pred_check_branch
      %20 = sbr.rel (0) target = $region17
    $region16: #{muster_forward.1} parent=1 // pred_region
      _
    $region17: #{muster_forward.1} parent=1 // pred_fallthru
      _
    // Predicated region
    $region18: #{muster_forward.1} parent=1 // pred_check
      _
    $region19: #{muster_forward.1} parent=1 // pred_check_branch
      %22 = sbr.rel (0) target = $region21
    $region20: #{muster_forward.1} parent=1 // pred_region
      _
    $region21: #{muster_forward.1} parent=1 // pred_fallthru
      _
    // Predicated region
    $region22: #{muster_forward.1} parent=1 // pred_check
      _
    $region23: #{muster_forward.1} parent=1 // pred_check_branch
      %24 = sbr.rel (0) target = $region25
    $region24: #{muster_forward.1} parent=1 // pred_region
      _
    $region25: #{muster_forward.1} parent=1 // pred_fallthru
      _
    // Predicated region
    $region26: #{muster_forward.1} parent=1 // pred_check
      _
    $region27: #{muster_forward.1} parent=1 // pred_check_branch
      %26 = sbr.rel (0) target = $region29
    $region28: #{muster_forward.1} parent=1 // pred_region
      _
    $region29: #{muster_forward.1} parent=1 // pred_fallthru
      _
    %v28 = vld [vmem:[%s0] sm:$0xf]
    %v29 = vld [vmem:[%s4] sm:$0xf]
    %v30 = vld [vmem:[%s4 + $0x4] sm:$0xf]
    %v31 = vld [vmem:[%s4 + $0x8] sm:$0xf]
    %v32 = vld [vmem:[%s4 + $0xc] sm:$0xf]
    %v33 = vld [vmem:[%s4 + $0x10] sm:$0xf]
    %v34 = vld [vmem:[%s4 + $0x14] sm:$0xf]
    %v35 = vld [vmem:[%s4 + $0x18] sm:$0xf]
    %v36 = vld [vmem:[%s4 + $0x1c] sm:$0xf]
    %v37 = vld [vmem:[%s4 + $0x20] sm:$0xf]
    %v38 = vld [vmem:[%s4 + $0x24] sm:$0xf]
    %v39 = vld [vmem:[%s4 + $0x28] sm:$0xf]
    %v40 = vld [vmem:[%s4 + $0x2c] sm:$0xf]
    %v41 = vld [vmem:[%s4 + $0x30] sm:$0xf]
    %v42 = vld [vmem:[%s4 + $0x34] sm:$0xf]
    %v43 = vld [vmem:[%s4 + $0x38] sm:$0xf]
    %v44 = vld [vmem:[%s4 + $0x3c] sm:$0xf]
    %v61 = vunpack.c.l.b16 %v29
    %v62 = vunpack.c.l.b16 %v30
    %v63 = vunpack.c.l.b16 %v31
    %v64 = vunpack.c.l.b16 %v32
    %v65 = vunpack.c.l.b16 %v33
    %v66 = vunpack.c.l.b16 %v34
    %v67 = vunpack.c.l.b16 %v35
    %v68 = vunpack.c.l.b16 %v36
    %v69 = vunpack.c.l.b16 %v37
    %v70 = vunpack.c.l.b16 %v38
    %v71 = vunpack.c.l.b16 %v39
    %v72 = vunpack.c.l.b16 %v40
    %v73 = vunpack.c.l.b16 %v41
    %v74 = vunpack.c.l.b16 %v42
    %v75 = vunpack.c.l.b16 %v43
    %v76 = vunpack.c.l.b16 %v44
    %v77 = vpack.c.b16 %v62, %v61
    %v78 = vpack.c.b16 %v64, %v63
    %v79 = vpack.c.b16 %v66, %v65
    %v80 = vpack.c.b16 %v68, %v67
    %v81 = vpack.c.b16 %v70, %v69
    %v82 = vpack.c.b16 %v72, %v71
    %v83 = vpack.c.b16 %v74, %v73
    %v84 = vpack.c.b16 %v76, %v75
    %93 = vmatprep.subr.bf16.mxu0 0
    %94 = vmatpush1.bf16.msra.mxu0 %v77
    %95 = vmatprep.subr.bf16.mxu0 0
    %96 = vmatpush1.bf16.msra.mxu0 %v78
    %97 = vmatprep.subr.bf16.mxu0 0
    %98 = vmatpush1.bf16.msra.mxu0 %v79
    %99 = vmatprep.subr.bf16.mxu0 0
    %100 = vmatpush1.bf16.msra.mxu0 %v80
    %101 = vmatprep.subr.bf16.mxu0 0
    %102 = vmatpush1.bf16.msra.mxu0 %v81
    %103 = vmatprep.subr.bf16.mxu0 0
    %104 = vmatpush1.bf16.msra.mxu0 %v82
    %105 = vmatprep.subr.bf16.mxu0 0
    %106 = vmatpush1.bf16.msra.mxu0 %v83
    %107 = vmatprep.subr.bf16.mxu0 0
    %108 = vmatpush1.bf16.msra.mxu0 %v84
    %109 = vmatprep.subr.bf16.mxu0 0
    %110 = vmatpush1.bf16.msra.mxu0 0
    %111 = vmatprep.subr.bf16.mxu0 0
    %112 = vmatpush1.bf16.msra.mxu0 0
    %113 = vmatprep.subr.bf16.mxu0 0
    %114 = vmatpush1.bf16.msra.mxu0 0
    %115 = vmatprep.subr.bf16.mxu0 0
    %116 = vmatpush1.bf16.msra.mxu0 0
    %117 = vmatprep.subr.bf16.mxu0 0
    %118 = vmatpush1.bf16.msra.mxu0 0
    %119 = vmatprep.subr.bf16.mxu0 0
    %120 = vmatpush1.bf16.msra.mxu0 0
    %121 = vmatprep.subr.bf16.mxu0 0
    %122 = vmatpush1.bf16.msra.mxu0 0
    %123 = vmatprep.subr.bf16.mxu0 0
    %124 = vmatpush1.bf16.msra.mxu0 0
    %125 = vmatprep.mubr.bf16.mxu0 0
    %126 = vmatmul.mubr.bf16.gmra.mrb[0].mxu0 %v28
    %v127 = vpop.f32.mrb[0].mxu0
    %v128 = vadd.f32 0.0, %v127
    %v129 = vpop.f32.mrb[0].mxu0
    %v130 = vpop.f32.mrb[0].mxu0
    %v131 = vpop.f32.mrb[0].mxu0
    %132 = vdwg.mxu0
    %v133 = vld [vmem:[%s3] sm:$0xf]
    %v134 = vpack.c.bf16 %v128, %v128
    %vm135 = vcmask 64512
    %v137 = vsel %vm135, %v133, 0
    %vm139 = vcmask 1043456
    %v141 = vsel %vm139, %v134, 0
    %143 = vmatprep.subr.bf16.mxu0 0
    %144 = vmatpush1.bf16.msra.mxu0 %v141
    %145 = vmatprep.subr.bf16.mxu0 0
    %146 = vmatpush1.bf16.msra.mxu0 0
    %147 = vmatprep.subr.bf16.mxu0 0
    %148 = vmatpush1.bf16.msra.mxu0 0
    %149 = vmatprep.subr.bf16.mxu0 0
    %150 = vmatpush1.bf16.msra.mxu0 0
    %151 = vmatprep.subr.bf16.mxu0 0
    %152 = vmatpush1.bf16.msra.mxu0 0
    %153 = vmatprep.subr.bf16.mxu0 0
    %154 = vmatpush1.bf16.msra.mxu0 0
    %155 = vmatprep.subr.bf16.mxu0 0
    %156 = vmatpush1.bf16.msra.mxu0 0
    %157 = vmatprep.subr.bf16.mxu0 0
    %158 = vmatpush1.bf16.msra.mxu0 0
    %159 = vmatprep.subr.bf16.mxu0 0
    %160 = vmatpush1.bf16.msra.mxu0 0
    %161 = vmatprep.subr.bf16.mxu0 0
    %162 = vmatpush1.bf16.msra.mxu0 0
    %163 = vmatprep.subr.bf16.mxu0 0
    %164 = vmatpush1.bf16.msra.mxu0 0
    %165 = vmatprep.subr.bf16.mxu0 0
    %166 = vmatpush1.bf16.msra.mxu0 0
    %167 = vmatprep.subr.bf16.mxu0 0
    %168 = vmatpush1.bf16.msra.mxu0 0
    %169 = vmatprep.subr.bf16.mxu0 0
    %170 = vmatpush1.bf16.msra.mxu0 0
    %171 = vmatprep.subr.bf16.mxu0 0
    %172 = vmatpush1.bf16.msra.mxu0 0
    %173 = vmatprep.subr.bf16.mxu0 0
    %174 = vmatpush1.bf16.msra.mxu0 0
    %175 = vmatprep.mubr.bf16.mxu0 0
    %176 = vmatmul.mubr.bf16.gmra.mrb[0].mxu0 %v137
    %v177 = vpop.f32.mrb[0].mxu0
    %v178 = vadd.f32 0.0, %v177
    %v179 = vpop.f32.mrb[0].mxu0
    %v180 = vpop.f32.mrb[0].mxu0
    %v181 = vpop.f32.mrb[0].mxu0
    %182 = vdwg.mxu0
    %v183 = vmax.f32 %v178, 0.0
    %v184 = vld [vmem:[%s5] sm:$0xff]
    %v185 = vld [vmem:[%s5 + $0x8] sm:$0x7]
    %v186 = vld [vmem:[%s6] sm:$0xf]
    %v187 = vld [vmem:[%s6 + $0x4] sm:$0xf]
    %v188 = vld [vmem:[%s6 + $0x8] sm:$0xf]
    %v189 = vld [vmem:[%s6 + $0xc] sm:$0xf]
    %v190 = vld [vmem:[%s6 + $0x10] sm:$0x1]
    %191 = vadd.xlane.f32.xlu0 %v183
    %v192 = vpop.xlane.xlu0 %191
    %v193 = vld [vmem:[%s1] sm:$0xf]
    %v194 = vunpack.c.l.bf16 %v193
    %vm195 = vcmask 523264
    %v196 = vsel %vm195, %v194, 0.0
    %197 = vadd.xlane.f32.xlu0 %v196
    %v198 = vpop.xlane.xlu0 %197
    %v199 = vld [vmem:[%s2] sm:$0x3]
    %v200 = vunpack.c.l.bf16 %v199
    %vm201 = vcmask 60416
    %v202 = vsel %vm201, %v200, 0.0
    %203 = vadd.xlane.f32.xlu0 %v202
    %v204 = vpop.xlane.xlu0 %203
    %v205 = vmul.f32 %v192, %v184
    %vm206 = vcmask 257024
    %v207 = vsel %vm206, %v205, 0.0
    %v208 = vrot.slane %v207, 4
    %v209 = vadd.f32 %v207, %v208
    %v210 = vrot.slane %v209, 2
    %v211 = vadd.f32 %v209, %v210
    %v212 = vrot.slane %v211, 1
    %v213 = vadd.f32 %v211, %v212
    %v215 = vrot.slane %v184, 4
    %v217 = vmul.f32 %v198, %v215
    %v218 = vsel %vm206, %v217, 0.0
    %v219 = vrot.slane %v218, 4
    %v220 = vadd.f32 %v218, %v219
    %v221 = vrot.slane %v220, 2
    %v222 = vadd.f32 %v220, %v221
    %v223 = vrot.slane %v222, 1
    %v224 = vadd.f32 %v222, %v223
    %v225 = vmul.f32 %v204, %v185
    %vm226 = vcmask 254976
    %v227 = vsel %vm226, %v225, 0.0
    %v228 = vrot.slane %v227, 4
    %v229 = vadd.f32 %v227, %v228
    %v230 = vrot.slane %v229, 2
    %v231 = vadd.f32 %v229, %v230
    %v232 = vrot.slane %v231, 1
    %v233 = vadd.f32 %v231, %v232
    %v234 = vadd.f32 %v213, %v224
    %v235 = vadd.f32 %v234, %v233
    %v236 = vadd.f32 %v235, %v185
    %v237 = vmax.f32 %v236, 0.0
    %v238 = vpack.c.bf16 %v237, %v237
    %v239 = vunpack.c.l.bf16 %v190
    %v241 = vrot.slane %v238, 1
    %v246 = vunpack.c.l.b16 %v186
    %v247 = vunpack.c.l.b16 %v187
    %v248 = vunpack.c.l.b16 %v188
    %v249 = vunpack.c.l.b16 %v189
    %v250 = vpack.c.b16 %v247, %v246
    %v251 = vpack.c.b16 %v249, %v248
    %vm254 = vcmask 261120
    %v256 = vsel %vm254, %v241, 0
    %258 = vmatprep.subr.bf16.mxu0 0
    %259 = vmatpush1.bf16.msra.mxu0 %v250
    %260 = vmatprep.subr.bf16.mxu0 0
    %261 = vmatpush1.bf16.msra.mxu0 %v251
    %262 = vmatprep.subr.bf16.mxu0 0
    %263 = vmatpush1.bf16.msra.mxu0 0
    %264 = vmatprep.subr.bf16.mxu0 0
    %265 = vmatpush1.bf16.msra.mxu0 0
    %266 = vmatprep.subr.bf16.mxu0 0
    %267 = vmatpush1.bf16.msra.mxu0 0
    %268 = vmatprep.subr.bf16.mxu0 0
    %269 = vmatpush1.bf16.msra.mxu0 0
    %270 = vmatprep.subr.bf16.mxu0 0
    %271 = vmatpush1.bf16.msra.mxu0 0
    %272 = vmatprep.subr.bf16.mxu0 0
    %273 = vmatpush1.bf16.msra.mxu0 0
    %274 = vmatprep.subr.bf16.mxu0 0
    %275 = vmatpush1.bf16.msra.mxu0 0
    %276 = vmatprep.subr.bf16.mxu0 0
    %277 = vmatpush1.bf16.msra.mxu0 0
    %278 = vmatprep.subr.bf16.mxu0 0
    %279 = vmatpush1.bf16.msra.mxu0 0
    %280 = vmatprep.subr.bf16.mxu0 0
    %281 = vmatpush1.bf16.msra.mxu0 0
    %282 = vmatprep.subr.bf16.mxu0 0
    %283 = vmatpush1.bf16.msra.mxu0 0
    %284 = vmatprep.subr.bf16.mxu0 0
    %285 = vmatpush1.bf16.msra.mxu0 0
    %286 = vmatprep.subr.bf16.mxu0 0
    %287 = vmatpush1.bf16.msra.mxu0 0
    %288 = vmatprep.subr.bf16.mxu0 0
    %289 = vmatpush1.bf16.msra.mxu0 0
    %290 = vmatprep.mubr.bf16.mxu0 0
    %291 = vmatmul.mubr.bf16.gmra.mrb[0].mxu0 %v256
    %v292 = vpop.f32.mrb[0].mxu0
    %v293 = vadd.f32 %v239, %v292
    %v294 = vpop.f32.mrb[0].mxu0
    %v295 = vpop.f32.mrb[0].mxu0
    %v296 = vpop.f32.mrb[0].mxu0
    %297 = vdwg.mxu0
    %vm298 = vcmask 16384
    %v299 = vsel %vm298, %v293, -inf
    %300 = vmax.xlane.f32.xlu0 %v299
    %v301 = vpop.xlane.xlu0 %300
    %v302 = vsub.f32 %v293, %v301
    %v303 = vmul.f32 %v302, 1.442695
    %v304 = vpow.pop %v303
    %v305 = vsel %vm298, %v304, 0.0
    %306 = vadd.xlane.f32.xlu0 %v305
    %v307 = vpop.xlane.xlu0 %306
    %v308 = vrcp.pop %v307
    %v309 = vmul.f32 %v304, %v308
    %310 = vst.msk [vmem:[#allocation2] sm:$0x1] %vm298, %v309
    %v311 = vmul.f32 %v192, %v215
    %v313 = vrot.slane %v311, 4
    %v315 = vsel %vm206, %v313, 0.0
    %v316 = vrot.slane %v315, 4
    %v317 = vadd.f32 %v315, %v316
    %v318 = vrot.slane %v317, 2
    %v319 = vadd.f32 %v317, %v318
    %v320 = vrot.slane %v319, 1
    %v321 = vadd.f32 %v319, %v320
    %v322 = vmul.f32 %v198, %v184
    %v324 = vrot.slane %v322, 4
    %v326 = vsel %vm206, %v324, 0.0
    %v327 = vrot.slane %v326, 4
    %v328 = vadd.f32 %v326, %v327
    %v329 = vrot.slane %v328, 2
    %v330 = vadd.f32 %v328, %v329
    %v331 = vrot.slane %v330, 1
    %v332 = vadd.f32 %v330, %v331
    %v334 = vrot.slane %v185, 6
    %v336 = vmul.f32 %v204, %v334
    %v338 = vrot.slane %v336, 2
    %v340 = vsel %vm226, %v338, 0.0
    %v341 = vrot.slane %v340, 4
    %v342 = vadd.f32 %v340, %v341
    %v343 = vrot.slane %v342, 2
    %v344 = vadd.f32 %v342, %v343
    %v345 = vrot.slane %v344, 1
    %v346 = vadd.f32 %v344, %v345
    %v347 = vadd.f32 %v321, %v332
    %v348 = vadd.f32 %v347, %v346
    %v349 = vadd.f32 %v348, %v185
    %v350 = vmax.f32 %v349, 0.0
    %v351 = vpack.c.bf16 %v350, %v350
    %v353 = vrot.slane %v351, 1
    %v355 = vsel %vm254, %v353, 0
    %357 = vmatprep.subr.bf16.mxu0 0
    %358 = vmatpush1.bf16.msra.mxu0 %v250
    %359 = vmatprep.subr.bf16.mxu0 0
    %360 = vmatpush1.bf16.msra.mxu0 %v251
    %361 = vmatprep.subr.bf16.mxu0 0
    %362 = vmatpush1.bf16.msra.mxu0 0
    %363 = vmatprep.subr.bf16.mxu0 0
    %364 = vmatpush1.bf16.msra.mxu0 0
    %365 = vmatprep.subr.bf16.mxu0 0
    %366 = vmatpush1.bf16.msra.mxu0 0
    %367 = vmatprep.subr.bf16.mxu0 0
    %368 = vmatpush1.bf16.msra.mxu0 0
    %369 = vmatprep.subr.bf16.mxu0 0
    %370 = vmatpush1.bf16.msra.mxu0 0
    %371 = vmatprep.subr.bf16.mxu0 0
    %372 = vmatpush1.bf16.msra.mxu0 0
    %373 = vmatprep.subr.bf16.mxu0 0
    %374 = vmatpush1.bf16.msra.mxu0 0
    %375 = vmatprep.subr.bf16.mxu0 0
    %376 = vmatpush1.bf16.msra.mxu0 0
    %377 = vmatprep.subr.bf16.mxu0 0
    %378 = vmatpush1.bf16.msra.mxu0 0
    %379 = vmatprep.subr.bf16.mxu0 0
    %380 = vmatpush1.bf16.msra.mxu0 0
    %381 = vmatprep.subr.bf16.mxu0 0
    %382 = vmatpush1.bf16.msra.mxu0 0
    %383 = vmatprep.subr.bf16.mxu0 0
    %384 = vmatpush1.bf16.msra.mxu0 0
    %385 = vmatprep.subr.bf16.mxu0 0
    %386 = vmatpush1.bf16.msra.mxu0 0
    %387 = vmatprep.subr.bf16.mxu0 0
    %388 = vmatpush1.bf16.msra.mxu0 0
    %389 = vmatprep.mubr.bf16.mxu0 0
    %390 = vmatmul.mubr.bf16.gmra.mrb[0].mxu0 %v355
    %v391 = vpop.f32.mrb[0].mxu0
    %v392 = vadd.f32 %v239, %v391
    %v393 = vpop.f32.mrb[0].mxu0
    %v394 = vpop.f32.mrb[0].mxu0
    %v395 = vpop.f32.mrb[0].mxu0
    %396 = vdwg.mxu0
    %v397 = vsel %vm298, %v392, -inf
    %398 = vmax.xlane.f32.xlu0 %v397
    %v399 = vpop.xlane.xlu0 %398
    %v400 = vsub.f32 %v392, %v399
    %v401 = vmul.f32 %v400, 1.442695
    %v402 = vpow.pop %v401
    %v403 = vsel %vm298, %v402, 0.0
    %404 = vadd.xlane.f32.xlu0 %v403
    %v405 = vpop.xlane.xlu0 %404
    %v406 = vrcp.pop %v405
    %v407 = vmul.f32 %v402, %v406
    %408 = vst.msk [vmem:[#allocation2 + $0x1] sm:$0x1] %vm298, %v407
    // Predicated region
    $region30: #{muster_forward.1} parent=1 // pred_check
      _
    $region31: #{muster_forward.1} parent=1 // pred_check_branch
      %410 = sbr.rel (0) target = $region33
    $region32: #{muster_forward.1} parent=1 // pred_region
      %s412 = ssub.s32 32, 32
      %413 = vsyncadd [#allocation3], %s412
      %s415 = sshll.u32 [#allocation2], 4
      %s416 = int_to_ptr.vmem [resolvable:$true] %s415
      %418 = dma.vmem_to_hbm [thread:$0]  %s416, 32, %s7, [#allocation3]
    $region33: #{muster_forward.1} parent=1 // pred_fallthru
      _
    // Predicated region
    $region34: #{muster_forward.1} parent=1 // pred_check
      _
    $region35: #{muster_forward.1} parent=1 // pred_check_branch
      %420 = sbr.rel (0) target = $region37
    $region36: #{muster_forward.1} parent=1 // pred_region
      %421 = dma.done [#allocation3], 32
    $region37: #{muster_forward.1} parent=1 // pred_fallthru
      _
    %422 = vsyncpa [#allocation3], 1

</llo_original>
